<compile_context>
chip_gen: v7x
topology: tpu7x:2x2x1
jax: 0.10.0
libtpu: 0.0.40
codegen_flags: <defaults>
</compile_context>

<pallas_src>
import functools

import jax
import jax.numpy as jnp
from jax.experimental import pallas as pl
from jax.experimental.pallas import tpu as pltpu


# ----------------------------------------------------------------------------
# Generation-keyed VMEM budgeting
# ----------------------------------------------------------------------------
def _round_up(x, m):
    return ((x + m - 1) // m) * m


def _tpu_caps():
    vmem_cap = None
    try:
        vmem_cap = int(pltpu.get_tpu_info().vmem_capacity_bytes)
    except Exception:
        vmem_cap = None
    kind = ""
    try:
        kind = jax.devices()[0].device_kind.lower()
    except Exception:
        pass
    is_v7 = ("v7" in kind) or (vmem_cap is not None and vmem_cap <= (80 << 20))
    if vmem_cap is None:
        vmem_cap = (64 << 20) if is_v7 else (128 << 20)
    return vmem_cap, is_v7


def _choose_tile(num_rows, per_row_bytes, fixed_bytes, budget_bytes, force_split):
    """Largest row-tile (multiple of 8) that fits the VMEM budget; on v7x the
    work is forced into >=2 tiles so both TensorCores stay busy."""
    avail = max(budget_bytes - fixed_bytes, 1 << 20)
    ts_cap = int(avail // max(per_row_bytes, 1))
    ts_cap = max(8, min(2048, (ts_cap // 8) * 8))
    num_tiles = max(1, -(-num_rows // ts_cap))
    if force_split and num_rows > 8:
        num_tiles = max(num_tiles, 2)
    ts = max(8, _round_up(-(-num_rows // num_tiles), 8))
    return ts


# ----------------------------------------------------------------------------
# Pallas kernel 1: farthest point sampling (VMEM-resident distance array)
# ----------------------------------------------------------------------------
def _fps_kernel(xyz_ref, out_ref, dist_ref):
    # xyz_ref: [1, 3, N] f32 (channels-first); out_ref: [1, 1, P] int32.
    n = xyz_ref.shape[2]
    npoint = out_ref.shape[2]
    x = xyz_ref[:, 0, :]                                    # [1, N]
    y = xyz_ref[:, 1, :]
    z = xyz_ref[:, 2, :]
    col = jax.lax.broadcasted_iota(jnp.int32, (1, n), 1)
    outcol = jax.lax.broadcasted_iota(jnp.int32, (1, npoint), 1)
    dist_ref[...] = jnp.full((1, n), 1e10, jnp.float32)
    out_ref[:, 0, :] = jnp.zeros((1, npoint), jnp.int32)

    @pl.loop(0, npoint)
    def _(i):
        dist = dist_ref[...]
        # argmax (first occurrence) of the running min-distance, all in vregs.
        m = jnp.max(dist, axis=-1, keepdims=True)
        far = jnp.min(jnp.where(dist == m, col, n), axis=-1, keepdims=True)
        out_ref[:, 0, :] = jnp.where(outcol == i, far, out_ref[:, 0, :])
        # extract the chosen centroid coords via one-hot masked sums (exact).
        sel = col == far
        cx = jnp.sum(jnp.where(sel, x, 0.0), axis=-1, keepdims=True)
        cy = jnp.sum(jnp.where(sel, y, 0.0), axis=-1, keepdims=True)
        cz = jnp.sum(jnp.where(sel, z, 0.0), axis=-1, keepdims=True)
        d = (x - cx) ** 2 + (y - cy) ** 2 + (z - cz) ** 2
        dist_ref[...] = jnp.minimum(dist, d)


def farthest_point_sample(xyz_cf, npoint):
    """xyz_cf: [B, 3, N] f32 (channels-first) -> [B, npoint] int32."""
    B, _, N = xyz_cf.shape
    out = pl.pallas_call(
        _fps_kernel,
        out_shape=jax.ShapeDtypeStruct((B, 1, npoint), jnp.int32),
        grid=(B,),
        in_specs=[pl.BlockSpec((1, 3, N), lambda b: (b, 0, 0))],
        out_specs=pl.BlockSpec((1, 1, npoint), lambda b: (b, 0, 0)),
        scratch_shapes=[pltpu.VMEM((1, N), jnp.float32)],
        compiler_params=pltpu.CompilerParams(
            dimension_semantics=("parallel",)),
    )(xyz_cf.astype(jnp.float32))
    return out.reshape(B, npoint)


# ----------------------------------------------------------------------------
# Pallas kernel 2: fused two-scale MLP chain + max-pool + concat
# ----------------------------------------------------------------------------
def fused_msg_mlp_pallas(x1, x2, params1, params2, *, first_is_preact=False):
    """x1: [G, K1, C1], x2: [G, K2, C2] grouped activations (f32 or bf16),
    same centroids.  params_i: list of (W [Cin, Cout] f32, b [Cout] f32),
    eval-mode BN already folded in.  If first_is_preact, the first conv layer
    of each scale has already been applied (x_i is its pre-ReLU output) and
    params_i holds only the remaining layers.
    Returns [G, Cout1 + Cout2] f32 (max over neighbors, concat over scales)."""
    G, K1, C1 = x1.shape
    G2, K2, C2 = x2.shape
    assert G2 == G, (x1.shape, x2.shape)

    # lane-pad the contraction dim to a multiple of 128 (exact: zero channels).
    def pad_x(x, target):
        c = x.shape[-1]
        if target != c:
            x = jnp.pad(x, ((0, 0), (0, 0), (0, target - c)))
        if x.dtype != jnp.bfloat16:
            x = x.astype(jnp.bfloat16)
        return x

    C1p = C1 if first_is_preact else _round_up(C1, 128)
    C2p = C2 if first_is_preact else _round_up(C2, 128)
    x1 = pad_x(x1, C1p)
    x2 = pad_x(x2, C2p)

    def prep(params, cin_pad):
        out = []
        for li, (w, b) in enumerate(params):
            w = jnp.asarray(w, jnp.float32)
            b = jnp.asarray(b, jnp.float32)
            if li == 0 and not first_is_preact and w.shape[0] != cin_pad:
                w = jnp.pad(w, ((0, cin_pad - w.shape[0]), (0, 0)))
            out.append((w.astype(jnp.bfloat16), b[None, :]))
        return out

    p1 = prep(list(params1), C1p)
    p2 = prep(list(params2), C2p)
    n1, n2 = len(p1), len(p2)
    Co1 = p1[-1][0].shape[1]
    Co2 = p2[-1][0].shape[1]
    Cout = Co1 + Co2

    widths = [C1p, C2p]
    for (w, _) in p1 + p2:
        widths.extend([int(w.shape[0]), int(w.shape[1])])
    cmax = max(widths)

    # VMEM budget model (conservative): double-buffered bf16 inputs + a few
    # live f32 intermediates of the widest layer at the larger K + f32 output.
    per_row = (2 * 2 * (K1 * C1p + K2 * C2p)
               + 4 * 4 * max(K1, K2) * cmax
               + 2 * 4 * Cout)
    fixed = sum(2 * 2 * int(w.size) + 2 * 4 * int(b.size) for (w, b) in p1 + p2)
    _, is_v7 = _tpu_caps()
    budget = (18 << 20) if is_v7 else (44 << 20)
    vmem_limit = (40 << 20) if is_v7 else (64 << 20)
    TS = _choose_tile(G, per_row, fixed, budget, force_split=is_v7)
    num_tiles = -(-G // TS)
    Gp = num_tiles * TS

    # Flatten to lane-dense 2-D [G*K, C] in the wrapper (contiguous, free) so
    # the kernel feeds the MXU directly without an in-kernel input relayout.
    x1f = x1.reshape(G * K1, C1p)
    x2f = x2.reshape(G * K2, C2p)
    if Gp != G:
        x1f = jnp.pad(x1f, ((0, (Gp - G) * K1), (0, 0)))
        x2f = jnp.pad(x2f, ((0, (Gp - G) * K2), (0, 0)))

    def kernel(x1_ref, x2_ref, *refs):
        o_ref = refs[-1]
        prm = refs[:-1]

        def chain(x_ref, rp, k):
            wb = [(rp[2 * j], rp[2 * j + 1]) for j in range(len(rp) // 2)]
            h = x_ref[...]
            if first_is_preact:
                h = h.astype(jnp.float32)
            else:
                w0, b0 = wb[0]
                wb = wb[1:]
                h = jnp.dot(h, w0[...],
                            preferred_element_type=jnp.float32) + b0[...]
            h = jnp.maximum(h, 0.0)
            for (w, b) in wb:
                h = jnp.dot(h.astype(jnp.bfloat16), w[...],
                            preferred_element_type=jnp.float32) + b[...]
                h = jnp.maximum(h, 0.0)
            c = h.shape[-1]
            return h.reshape(TS, k, c).max(axis=1)

        o1 = chain(x1_ref, prm[:2 * n1], K1)
        o2 = chain(x2_ref, prm[2 * n1:], K2)
        o_ref[...] = jnp.concatenate([o1, o2], axis=-1)

    in_specs = [pl.BlockSpec((TS * K1, C1p), lambda i: (i, 0)),
                pl.BlockSpec((TS * K2, C2p), lambda i: (i, 0))]
    flat_params = []
    for (w, b) in p1 + p2:
        in_specs.append(pl.BlockSpec(tuple(w.shape), lambda i: (0, 0)))
        in_specs.append(pl.BlockSpec(tuple(b.shape), lambda i: (0, 0)))
        flat_params.extend([w, b])

    out = pl.pallas_call(
        kernel,
        out_shape=jax.ShapeDtypeStruct((Gp, Cout), jnp.float32),
        grid=(num_tiles,),
        in_specs=in_specs,
        out_specs=pl.BlockSpec((TS, Cout), lambda i: (i, 0)),
        compiler_params=pltpu.CompilerParams(
            dimension_semantics=("parallel",),
            vmem_limit_bytes=vmem_limit),
    )(x1f, x2f, *flat_params)
    return out[:G]


# ----------------------------------------------------------------------------
# Pure-JAX references (mirror the kernels' quantization exactly)
# ----------------------------------------------------------------------------
def _ref_mlp_maxpool(grouped, params, first_is_preact=False):
    G, K, Cin = grouped.shape
    h = grouped.reshape(G * K, Cin).astype(jnp.bfloat16)
    params = list(params)
    if first_is_preact:
        h = h.astype(jnp.float32)
    else:
        w0, b0 = params[0]
        params = params[1:]
        h = jnp.dot(h, w0.astype(jnp.bfloat16),
                    preferred_element_type=jnp.float32) + b0[None, :]
    h = jnp.maximum(h, 0.0)
    for (w, b) in params:
        h = jnp.dot(h.astype(jnp.bfloat16), w.astype(jnp.bfloat16),
                    preferred_element_type=jnp.float32) + b[None, :]
        h = jnp.maximum(h, 0.0)
    C = h.shape[-1]
    return h.reshape(G, K, C).max(axis=1)


def _fps_ref(xyz_t, npoint):
    B, N, _ = xyz_t.shape

    def body(i, state):
        centroids, distance, farthest = state
        centroids = centroids.at[:, i].set(farthest)
        centroid = jax.vmap(lambda p, f: p[f])(xyz_t, farthest)
        diff = xyz_t - centroid[:, None, :]
        d = diff[..., 0] ** 2 + diff[..., 1] ** 2 + diff[..., 2] ** 2
        distance = jnp.minimum(distance, d)
        farthest = jnp.argmax(distance, axis=-1).astype(jnp.int32)
        return centroids, distance, farthest

    init = (jnp.zeros((B, npoint), jnp.int32),
            jnp.full((B, N), 1e10, jnp.float32),
            jnp.zeros((B,), jnp.int32))
    c, _, _ = jax.lax.fori_loop(0, npoint, body, init)
    return c


# ----------------------------------------------------------------------------
# PointNet++ glue (data-dependent grouping) — plain JAX
# ----------------------------------------------------------------------------
def index_points(points, idx):
    # points: [B, N, C], idx: [B, ...] int32 -> [B, ..., C]
    return jax.vmap(lambda p, i: p[i])(points, idx)


def square_distance(src, dst):
    return (jnp.sum(src * src, -1)[:, :, None]
            + jnp.sum(dst * dst, -1)[:, None, :]
            - 2.0 * jnp.einsum("bsc,bnc->bsn", src, dst))


def query_ball_point(radius, nsample, xyz, new_xyz):
    # xyz: [B, N, 3], new_xyz: [B, S, 3] -> [B, S, nsample] int32
    B, N, _ = xyz.shape
    sqrdists = square_distance(new_xyz, xyz)
    group_idx = jnp.broadcast_to(jnp.arange(N, dtype=jnp.int32), sqrdists.shape)
    group_idx = jnp.where(sqrdists > radius * radius, N, group_idx)
    neg_topk, _ = jax.lax.top_k(-group_idx, nsample)     # smallest indices
    group_idx = -neg_topk
    group_first = jnp.broadcast_to(group_idx[:, :, :1], group_idx.shape)
    group_idx = jnp.where(group_idx == N, group_first, group_idx)
    return group_idx


def set_abstraction_msg(xyz, points, cfg, params):
    """xyz: [B, 3, N] (channels first), points: [B, D, N] or None."""
    npoint, radii, nsamples = cfg["npoint"], cfg["radii"], cfg["nsamples"]
    B, _, N = xyz.shape
    S = npoint
    xyz_t = jnp.transpose(xyz, (0, 2, 1))                              # [B, N, 3]

    fps_idx = farthest_point_sample(xyz, S)                            # Pallas
    new_xyz = index_points(xyz_t, fps_idx)                             # [B, S, 3]

    assert len(radii) == 2 and len(nsamples) == 2
    xs, scale_params, preact = [], [], False
    if points is None:
        # SA1: only input channels are centered xyz and the first 1x1 conv is
        # linear before ReLU, so hoist it: W1·(p-c)+b1 = (W1·p)[idx] - W1·c + b1.
        preact = True
        for (radius, K), sp in zip(zip(radii, nsamples), params):
            w1, b1 = sp[0]
            y_all = jnp.einsum("bnc,cd->bnd", xyz_t, w1)               # [B, N, C]
            y_cent = jnp.einsum("bsc,cd->bsd", new_xyz, w1)            # [B, S, C]
            gidx = query_ball_point(radius, K, xyz_t, new_xyz)         # [B, S, K]
            g = index_points(y_all, gidx) - y_cent[:, :, None, :] + b1
            xs.append(g.reshape(B * S, K, -1).astype(jnp.bfloat16))
            scale_params.append(list(sp[1:]))
    else:
        points_t = jnp.transpose(points, (0, 2, 1))                    # [B, N, D]
        cin = points_t.shape[-1] + 3
        cin_pad = _round_up(cin, 128)
        for (radius, K), sp in zip(zip(radii, nsamples), params):
            gidx = query_ball_point(radius, K, xyz_t, new_xyz)
            gxyz = index_points(xyz_t, gidx) - new_xyz[:, :, None, :]
            gpts = index_points(points_t, gidx)
            pieces = [gpts, gxyz]
            if cin_pad != cin:
                pieces.append(jnp.zeros((B, S, K, cin_pad - cin), jnp.float32))
            g = jnp.concatenate(pieces, axis=-1).astype(jnp.bfloat16)
            xs.append(g.reshape(B * S, K, cin_pad))
            scale_params.append(list(sp))

    out = fused_msg_mlp_pallas(xs[0], xs[1], scale_params[0], scale_params[1],
                               first_is_preact=preact)
    new_points = out.reshape(B, S, -1)
    return (jnp.transpose(new_xyz, (0, 2, 1)),                         # [B, 3, S]
            jnp.transpose(new_points, (0, 2, 1)))                      # [B, C, S]


# ----------------------------------------------------------------------------
# Model definition (input_dim=3 -> extra_features is None, dropout is a no-op)
# ----------------------------------------------------------------------------
SA_CONFIGS = [
    dict(npoint=1024, radii=[0.05, 0.1], nsamples=[16, 32], in_channel=3,
         mlp_list=[[16, 16, 32], [32, 32, 64]]),
    dict(npoint=256, radii=[0.1, 0.2], nsamples=[16, 32], in_channel=64 + 32 + 3,
         mlp_list=[[64, 64, 128], [64, 96, 128]]),
    dict(npoint=64, radii=[0.2, 0.4], nsamples=[16, 32], in_channel=128 + 128 + 3,
         mlp_list=[[128, 196, 256], [128, 196, 256]]),
    dict(npoint=16, radii=[0.4, 0.8], nsamples=[16, 32], in_channel=256 + 256 + 3,
         mlp_list=[[256, 256, 512], [256, 384, 512]]),
]


def _fold_conv_bn(w, b, gamma, beta, mean, var, eps=1e-5):
    scale = gamma / jnp.sqrt(var + eps)
    return w * scale[None, :], b * scale + (beta - mean * scale)


def init_msg_params(key, in_channel, mlp_list):
    params = []
    for mlp in mlp_list:
        scale_params = []
        last = in_channel
        for cout in mlp:
            key, kw, kb = jax.random.split(key, 3)
            w = jax.random.normal(kw, (last, cout), jnp.float32) * 0.1
            b = jax.random.normal(kb, (cout,), jnp.float32) * 0.01
            gamma = jnp.ones((cout,), jnp.float32)
            beta = jnp.zeros((cout,), jnp.float32)
            mean = jnp.zeros((cout,), jnp.float32)
            var = jnp.ones((cout,), jnp.float32)
            scale_params.append(_fold_conv_bn(w, b, gamma, beta, mean, var))
            last = cout
        params.append(scale_params)
    return key, params


def feature_learner_forward(x, extra_features, all_params):
    """Returns (sa1_xyz, sa1_feat, ..., sa4_xyz, sa4_feat) like the PyTorch module."""
    xyz, feats = x, extra_features
    outs = []
    for cfg, params in zip(SA_CONFIGS, all_params):
        xyz, feats = set_abstraction_msg(xyz, feats, cfg, params)
        outs.extend([xyz, feats])
    return tuple(outs)


if __name__ == "__main__":
    key = jax.random.PRNGKey(0)
    key, kx = jax.random.split(key)

    B, N = 2, 2048                       # N >= npoint(sa1)=1024
    x = jax.random.uniform(kx, (B, 3, N), jnp.float32)
    extra_features = None                # input_dim = 3 -> no extra features

    all_params = []
    for cfg in SA_CONFIGS:
        key, params = init_msg_params(key, cfg["in_channel"], cfg["mlp_list"])
        all_params.append(params)

    # --- 1) FPS Pallas kernel vs pure-JAX reference ---------------------------
    key, kf = jax.random.split(key)
    pts = jax.random.uniform(kf, (2, 3, 512), jnp.float32)
    got_idx = farthest_point_sample(pts, 128)
    ref_idx = _fps_ref(jnp.transpose(pts, (0, 2, 1)), 128)
    jax.block_until_ready((got_idx, ref_idx))
    match = float(jnp.mean((got_idx == ref_idx).astype(jnp.float32)))
    assert match >= 0.95, f"FPS kernel mismatch: match fraction = {match}"

    # --- 2) fused MSG kernel vs reference (SA2 shapes, non-multiple G) --------
    key, kc, kd = jax.random.split(key, 3)
    g1 = jax.random.uniform(kc, (205, 16, 99), jnp.float32, minval=-1.0, maxval=1.0)
    g2 = jax.random.uniform(kd, (205, 32, 99), jnp.float32, minval=-1.0, maxval=1.0)
    p1, p2 = all_params[1]
    got = fused_msg_mlp_pallas(g1, g2, p1, p2)
    ref = jnp.concatenate([_ref_mlp_maxpool(g1, p1), _ref_mlp_maxpool(g2, p2)],
                          axis=-1)
    jax.block_until_ready((got, ref))
    err = float(jnp.max(jnp.abs(got - ref)))
    assert err < 2e-2, f"fused kernel mismatch: max abs err = {err}"

    # --- 3) fused MSG kernel, SA1 (pre-activation / hoisted layer-1) path -----
    key, ke, kg = jax.random.split(key, 3)
    h1 = jax.random.uniform(ke, (100, 16, 16), jnp.float32, minval=-1.0, maxval=1.0)
    h2 = jax.random.uniform(kg, (100, 32, 32), jnp.float32, minval=-1.0, maxval=1.0)
    q1, q2 = all_params[0]
    got = fused_msg_mlp_pallas(h1, h2, q1[1:], q2[1:], first_is_preact=True)
    ref = jnp.concatenate(
        [_ref_mlp_maxpool(h1, q1[1:], first_is_preact=True),
         _ref_mlp_maxpool(h2, q2[1:], first_is_preact=True)], axis=-1)
    jax.block_until_ready((got, ref))
    err = float(jnp.max(jnp.abs(got - ref)))
    assert err < 2e-2, f"preact kernel mismatch: max abs err = {err}"

    # --- full forward pass -----------------------------------------------------
    fwd = jax.jit(functools.partial(feature_learner_forward,
                                    extra_features=None,
                                    all_params=all_params))
    outs = fwd(x)
    jax.block_until_ready(outs)

    # shape sanity checks (match PyTorch module output shapes)
    assert outs[0].shape == (B, 3, 1024) and outs[1].shape == (B, 96, 1024)
    assert outs[2].shape == (B, 3, 256) and outs[3].shape == (B, 256, 256)
    assert outs[4].shape == (B, 3, 64) and outs[5].shape == (B, 512, 64)
    assert outs[6].shape == (B, 3, 16) and outs[7].shape == (B, 1024, 16)
    assert all(o.dtype == jnp.float32 for o in outs)
    assert all(bool(jnp.all(jnp.isfinite(o))) for o in outs)

    print("KERNEL_OK")
</pallas_src>

<mosaic_0001>
module attributes {stable_mosaic.version = 11 : i64} {
  func.func @_fps_kernel(%arg0: i32, %arg1: memref<1x3x512xf32, #tpu.memory_space<vmem>>, %arg2: memref<1x1x128xi32, #tpu.memory_space<vmem>>, %arg3: memref<1x512xf32, #tpu.memory_space<vmem>>) attributes {dimension_semantics = [#tpu.dimension_semantics<parallel>], iteration_bounds = array<i64: 2>, scalar_prefetch = 0 : i64, scratch_operands = 1 : i64, tpu.core_type = #tpu.core_type<tc>, window_params = [{transform_indices = @transform_0, window_bounds = array<i64: 1, 3, 512>}, {transform_indices = @transform_1, window_bounds = array<i64: 1, 1, 128>}]} {
    %c0 = arith.constant 0 : index
    %c0_0 = arith.constant 0 : index
    %c0_1 = arith.constant 0 : index
    %0 = vector.load %arg1[%c0, %c0_0, %c0_1] : memref<1x3x512xf32, #tpu.memory_space<vmem>>, vector<1x1x512xf32>
    %1 = vector.shape_cast %0 : vector<1x1x512xf32> to vector<1x512xf32>
    %c0_2 = arith.constant 0 : index
    %c1 = arith.constant 1 : index
    %c0_3 = arith.constant 0 : index
    %2 = vector.load %arg1[%c0_2, %c1, %c0_3] : memref<1x3x512xf32, #tpu.memory_space<vmem>>, vector<1x1x512xf32>
    %3 = vector.shape_cast %2 : vector<1x1x512xf32> to vector<1x512xf32>
    %c0_4 = arith.constant 0 : index
    %c2 = arith.constant 2 : index
    %c0_5 = arith.constant 0 : index
    %4 = vector.load %arg1[%c0_4, %c2, %c0_5] : memref<1x3x512xf32, #tpu.memory_space<vmem>>, vector<1x1x512xf32>
    %5 = vector.shape_cast %4 : vector<1x1x512xf32> to vector<1x512xf32>
    %6 = tpu.iota {dimensions = array<i32: 1>} : vector<1x512xi32>
    %7 = tpu.iota {dimensions = array<i32: 1>} : vector<1x128xi32>
    %cst = arith.constant 1.000000e+10 : f32
    %8 = vector.broadcast %cst : f32 to vector<1x512xf32>
    %c0_6 = arith.constant 0 : index
    %c0_7 = arith.constant 0 : index
    %9 = vector.load %arg3[%c0_6, %c0_7] : memref<1x512xf32, #tpu.memory_space<vmem>>, vector<1x512xf32>
    tpu.vector_store %arg3[%c0_6, %c0_7], %8 {strides = array<i32>} : memref<1x512xf32, #tpu.memory_space<vmem>>, vector<1x512xf32>,
    %c0_i32 = arith.constant 0 : i32
    %10 = vector.broadcast %c0_i32 : i32 to vector<1x128xi32>
    %c0_8 = arith.constant 0 : index
    %c0_9 = arith.constant 0 : index
    %c0_10 = arith.constant 0 : index
    %11 = vector.load %arg2[%c0_8, %c0_9, %c0_10] : memref<1x1x128xi32, #tpu.memory_space<vmem>>, vector<1x1x128xi32>
    %12 = vector.shape_cast %11 : vector<1x1x128xi32> to vector<1x128xi32>
    %13 = vector.shape_cast %10 : vector<1x128xi32> to vector<1x1x128xi32>
    tpu.vector_store %arg2[%c0_8, %c0_9, %c0_10], %13 {strides = array<i32>} : memref<1x1x128xi32, #tpu.memory_space<vmem>>, vector<1x1x128xi32>,
    %c0_i32_11 = arith.constant 0 : i32
    %c128_i32 = arith.constant 128 : i32
    %14 = arith.addi %c0_i32_11, %c128_i32 : i32
    %c1_i32 = arith.constant 1 : i32
    scf.for %arg4 = %c0_i32_11 to %14 step %c1_i32  : i32 {
      %c1_i32_13 = arith.constant 1 : i32
      %15 = arith.muli %arg4, %c1_i32_13 : i32
      %c0_i32_14 = arith.constant 0 : i32
      %16 = arith.addi %c0_i32_14, %15 : i32
      %c0_15 = arith.constant 0 : index
      %c0_16 = arith.constant 0 : index
      %17 = vector.load %arg3[%c0_15, %c0_16] : memref<1x512xf32, #tpu.memory_space<vmem>>, vector<1x512xf32>
      %cst_17 = arith.constant dense<0xFF800000> : vector<1xf32>
      %18 = vector.multi_reduction <maximumf>, %17, %cst_17 [1] : vector<1x512xf32> to vector<1xf32>
      %19 = vector.shape_cast %18 : vector<1xf32> to vector<1x1xf32>
      %20 = vector.broadcast %19 : vector<1x1xf32> to vector<1x512xf32>
      %21 = arith.cmpf oeq, %17, %20 : vector<1x512xf32>
      %c512_i32 = arith.constant 512 : i32
      %22 = vector.broadcast %c512_i32 : i32 to vector<1x512xi32>
      %23 = arith.select %21, %6, %22 : vector<1x512xi1>, vector<1x512xi32>
      %cst_18 = arith.constant dense<2147483647> : vector<1xi32>
      %24 = vector.multi_reduction <minsi>, %23, %cst_18 [1] : vector<1x512xi32> to vector<1xi32>
      %25 = vector.shape_cast %24 : vector<1xi32> to vector<1x1xi32>
      %26 = vector.broadcast %16 : i32 to vector<1x128xi32>
      %27 = arith.cmpi eq, %7, %26 : vector<1x128xi32>
      %c0_19 = arith.constant 0 : index
      %c0_20 = arith.constant 0 : index
      %c0_21 = arith.constant 0 : index
      %28 = vector.load %arg2[%c0_19, %c0_20, %c0_21] : memref<1x1x128xi32, #tpu.memory_space<vmem>>, vector<1x1x128xi32>
      %29 = vector.shape_cast %28 : vector<1x1x128xi32> to vector<1x128xi32>
      %30 = vector.shape_cast %25 : vector<1x1xi32> to vector<1x1xi32>
      %31 = vector.broadcast %30 : vector<1x1xi32> to vector<1x128xi32>
      %32 = arith.select %27, %31, %29 : vector<1x128xi1>, vector<1x128xi32>
      %c0_22 = arith.constant 0 : index
      %c0_23 = arith.constant 0 : index
      %c0_24 = arith.constant 0 : index
      %33 = vector.load %arg2[%c0_22, %c0_23, %c0_24] : memref<1x1x128xi32, #tpu.memory_space<vmem>>, vector<1x1x128xi32>
      %34 = vector.shape_cast %33 : vector<1x1x128xi32> to vector<1x128xi32>
      %35 = vector.shape_cast %32 : vector<1x128xi32> to vector<1x1x128xi32>
      tpu.vector_store %arg2[%c0_22, %c0_23, %c0_24], %35 {strides = array<i32>} : memref<1x1x128xi32, #tpu.memory_space<vmem>>, vector<1x1x128xi32>,
      %36 = vector.broadcast %25 : vector<1x1xi32> to vector<1x512xi32>
      %37 = arith.cmpi eq, %6, %36 : vector<1x512xi32>
      %cst_25 = arith.constant 0.000000e+00 : f32
      %38 = vector.broadcast %cst_25 : f32 to vector<1x512xf32>
      %39 = arith.select %37, %1, %38 : vector<1x512xi1>, vector<1x512xf32>
      %cst_26 = arith.constant dense<0.000000e+00> : vector<1xf32>
      %40 = vector.multi_reduction <add>, %39, %cst_26 [1] : vector<1x512xf32> to vector<1xf32>
      %41 = vector.shape_cast %40 : vector<1xf32> to vector<1x1xf32>
      %cst_27 = arith.constant 0.000000e+00 : f32
      %42 = vector.broadcast %cst_27 : f32 to vector<1x512xf32>
      %43 = arith.select %37, %3, %42 : vector<1x512xi1>, vector<1x512xf32>
      %cst_28 = arith.constant dense<0.000000e+00> : vector<1xf32>
      %44 = vector.multi_reduction <add>, %43, %cst_28 [1] : vector<1x512xf32> to vector<1xf32>
      %45 = vector.shape_cast %44 : vector<1xf32> to vector<1x1xf32>
      %cst_29 = arith.constant 0.000000e+00 : f32
      %46 = vector.broadcast %cst_29 : f32 to vector<1x512xf32>
      %47 = arith.select %37, %5, %46 : vector<1x512xi1>, vector<1x512xf32>
      %cst_30 = arith.constant dense<0.000000e+00> : vector<1xf32>
      %48 = vector.multi_reduction <add>, %47, %cst_30 [1] : vector<1x512xf32> to vector<1xf32>
      %49 = vector.shape_cast %48 : vector<1xf32> to vector<1x1xf32>
      %50 = vector.broadcast %41 : vector<1x1xf32> to vector<1x512xf32>
      %51 = arith.subf %1, %50 : vector<1x512xf32>
      %52 = arith.mulf %51, %51 : vector<1x512xf32>
      %53 = vector.broadcast %45 : vector<1x1xf32> to vector<1x512xf32>
      %54 = arith.subf %3, %53 : vector<1x512xf32>
      %55 = arith.mulf %54, %54 : vector<1x512xf32>
      %56 = arith.addf %52, %55 : vector<1x512xf32>
      %57 = vector.broadcast %49 : vector<1x1xf32> to vector<1x512xf32>
      %58 = arith.subf %5, %57 : vector<1x512xf32>
      %59 = arith.mulf %58, %58 : vector<1x512xf32>
      %60 = arith.addf %56, %59 : vector<1x512xf32>
      %61 = arith.minimumf %17, %60 : vector<1x512xf32>
      %c0_31 = arith.constant 0 : index
      %c0_32 = arith.constant 0 : index
      %62 = vector.load %arg3[%c0_31, %c0_32] : memref<1x512xf32, #tpu.memory_space<vmem>>, vector<1x512xf32>
      tpu.vector_store %arg3[%c0_31, %c0_32], %61 {strides = array<i32>} : memref<1x512xf32, #tpu.memory_space<vmem>>, vector<1x512xf32>,
    }
    %c128_i32_12 = arith.constant 128 : i32
    return
  }
  func.func @transform_0(%arg0: i32) -> (i32, i32, i32) {
    %c0_i32 = arith.constant 0 : i32
    %c0_i32_0 = arith.constant 0 : i32
    %c0_i32_1 = arith.constant 0 : i32
    return %arg0, %c0_i32, %c0_i32_0 : i32, i32, i32
  }
  func.func @transform_1(%arg0: i32) -> (i32, i32, i32) {
    %c0_i32 = arith.constant 0 : i32
    %c0_i32_0 = arith.constant 0 : i32
    %c0_i32_1 = arith.constant 0 : i32
    return %arg0, %c0_i32, %c0_i32_0 : i32, i32, i32
  }
}

</mosaic_0001>

<llo_original>
// kernel: tpu_custom_call.1
$region0: #{tpu_custom_call.1}
  #allocation0 [shape = 'u32[]', space=smem, size = 0x4, offset = 0x4, fixed_abs, tag = 'smem constant byte address 0x4 - core index']
  #allocation1 [shape = 'u32[144,128]{1,0:T(1,128)}', space=vmem, size = 0x12000, scoped, tag = 'internal scratch']
  #allocation2 [shape = 'f32[1,512]{1,0:T(1,128)}', space=vmem, size = 0x800, scoped, tag = 'scratch operand']
  %s0 = inlined_call_operand.vmem [shape: f32[2,3,512], index: 0, kind: input, shape index: {}]
  %s1 = inlined_call_operand.hbm [shape: s32[2,1,128], index: 1, kind: output, shape index: {}]
  %s2 = sld [smem:[#allocation0]]
  $region44: #{tpu_custom_call.1} parent=0
    _
  %s4 = ssub.s32 1, %s2
  %s5 = scalar_select 0, %s4, %s2
  $region1: #{tpu_custom_call.1} parent=0
    #allocation3 [shape = 'u8[1024]{0}', space=vmem, size = 0x400, scoped, tag = 'output window, operand 0']
    #allocation4 [shape = 's32[2]{0}', space=sflag, size = 0x8, scoped, tag = 'scoped memory for tpu_custom_call.1']
    %6 = vsyncpa [#allocation4], 0
    %s7 = scalar_lea.sflag [#allocation4], 1
    %8 = vsyncpa %s7, 0
    loop: start=0, step=1, limit=4
    $region2: #{tpu_custom_call.1} parent=1 // loop_pre_header
      _
    $region3: #{tpu_custom_call.1} parent=1 // loop_header
      %s10 = sphi 0, %s14
      %p11 = scmp.ge.s32.totalorder %s10, 4
      %s20 = sphi 0, %s22
      %s23 = sphi 0, %s20
      %s24 = sphi 0, %s23
      %s40 = sphi 0, %s24
      %s46 = sphi 0, %s48
      %s49 = sphi 0, %s46
      %s50 = sphi 0, %s49
      %s66 = sphi 0, %s50
    $region4: #{tpu_custom_call.1} parent=1 // loop_header_branch
      %13 = sbr.rel (%p11) target = $region8
    $region5: #{tpu_custom_call.1} parent=1 // loop_body
      %s15 = ssub.s32 %s10, 1
      %s16 = ssub.s32 %s10, 2
      %s17 = sadd.s32 %s10, 1
      %s18 = ssub.s32 %s10, %s17
      %p19 = scmp.eq.s32.totalorder %s18, 0
      %s21 = sadd.s32 %s20, 1
      %s22 = scalar_select %p19, %s20, %s21
      %p25 = pneg %p19
      %p26 = scmp.eq.s32.totalorder %s10, 1
      %p27 = por %p25, %p26
      %p28 = scmp.ne.s32.totalorder %s20, %s23
      %p29 = scmp.eq.s32.totalorder %s10, 0
      %p30 = por %p28, %p29
      %p31 = scmp.ne.s32.totalorder %s20, %s23
      %p32 = scmp.eq.s32.totalorder %s15, 1
      %p33 = por %p31, %p32
      %p34 = scmp.ne.s32.totalorder %s23, %s24
      %p35 = scmp.eq.s32.totalorder %s15, 0
      %p36 = por %p34, %p35
      %p37 = scmp.ne.s32.totalorder %s23, %s24
      %p38 = scmp.eq.s32.totalorder %s16, 1
      %p39 = por %p37, %p38
      %p41 = scmp.ne.s32.totalorder %s24, %s40
      %p42 = scmp.eq.s32.totalorder %s16, 0
      %p43 = por %p41, %p42
      %s44 = ssub.s32 %s10, %s17
      %p45 = scmp.eq.s32.totalorder %s44, 0
      %s47 = sadd.s32 %s46, 1
      %s48 = scalar_select %p45, %s46, %s47
      %p51 = pneg %p45
      %p52 = scmp.eq.s32.totalorder %s10, 1
      %p53 = por %p51, %p52
      %p54 = scmp.ne.s32.totalorder %s46, %s49
      %p55 = scmp.eq.s32.totalorder %s10, 0
      %p56 = por %p54, %p55
      %p57 = scmp.ne.s32.totalorder %s46, %s49
      %p58 = scmp.eq.s32.totalorder %s15, 1
      %p59 = por %p57, %p58
      %p60 = scmp.ne.s32.totalorder %s49, %s50
      %p61 = scmp.eq.s32.totalorder %s15, 0
      %p62 = por %p60, %p61
      %p63 = scmp.ne.s32.totalorder %s49, %s50
      %p64 = scmp.eq.s32.totalorder %s16, 1
      %p65 = por %p63, %p64
      %p67 = scmp.ne.s32.totalorder %s50, %s66
      %p68 = scmp.eq.s32.totalorder %s16, 0
      %p69 = por %p67, %p68
      %p70 = scmp.le.s32.totalorder 1, %s10
      %p71 = scmp.lt.s32.totalorder %s10, 3
      %p72 = pnand %p70, %p71
      %p73 = pneg %p72
      // Predicated region
      $region9: #{tpu_custom_call.1} parent=5 // pred_check
        _
      $region10: #{tpu_custom_call.1} parent=5 // pred_check_branch
        %75 = sbr.rel (%p72) target = $region12
      $region11: #{tpu_custom_call.1} parent=5 // pred_region
        %s76 = ssub.s32 %s10, 1
      $region12: #{tpu_custom_call.1} parent=5 // pred_fallthru
        _
      %p77 = scmp.lt.s32.totalorder %s10, 2
      // Predicated region
      $region13: #{tpu_custom_call.1} parent=5 // pred_check
        %p78 = pneg %p77
      $region14: #{tpu_custom_call.1} parent=5 // pred_check_branch
        %80 = sbr.rel (%p78) target = $region16
      $region15: #{tpu_custom_call.1} parent=5 // pred_region
        // Predicated region
        $region17: #{tpu_custom_call.1} parent=15 // pred_check
          %p81 = pneg %p30
        $region18: #{tpu_custom_call.1} parent=15 // pred_check_branch
          %83 = sbr.rel (%p81) target = $region20
        $region19: #{tpu_custom_call.1} parent=15 // pred_region
          %p84 = scmp.lt.s32.totalorder %s10, 1
          %s85 = scalar_select %p84, %s10, 1
          %s86 = smul.addr %s85, 4
          %s87 = smul.addr %s86, 4
          %s88 = scalar_lea.vmem %s0, %s87
        $region20: #{tpu_custom_call.1} parent=15 // pred_fallthru
          _
      $region16: #{tpu_custom_call.1} parent=5 // pred_fallthru
        _
      %p89 = scmp.le.s32.totalorder 1, %s10
      %p90 = scmp.lt.s32.totalorder %s10, 3
      %p91 = pnand %p89, %p90
      %p92 = pneg %p91
      // Predicated region
      $region21: #{tpu_custom_call.1} parent=5 // pred_check
        _
      $region22: #{tpu_custom_call.1} parent=5 // pred_check_branch
        %94 = sbr.rel (%p91) target = $region24
      $region23: #{tpu_custom_call.1} parent=5 // pred_region
        %s95 = ssub.s32 %s10, 1
        %p96 = scmp.lt.s32.totalorder %s15, 1
        %s97 = scalar_select %p96, %s15, 1
        %s98 = smul.addr %s97, 4
        %s99 = smul.addr %s98, 4
        %s100 = scalar_lea.vmem %s0, %s99
        %p101 = pneg %p36
        %p102 = pneg %p33
        %p103 = pneg %p62
        %p104 = pneg %p59
        %s105 = sand.u32 %s49, 1
        %s106 = scalar_lea.sflag [#allocation4], %s105
        %s107 = sand.u32 %s49, 1
        %s108 = scalar_lea.vmem [#allocation3], %s107
        %p109 = scmp.lt.s32.totalorder %s15, 1
        %s110 = scalar_select %p109, %s15, 1
        %s111 = smul.addr %s110, 4
        %s112 = smul.addr %s111, 4
        %s113 = scalar_lea.vmem %s0, %s112
        %v114 = vld [vmem:[%s113] ss:$4 sm:$0xf]
        %s115 = scalar_lea.vmem %s113, 1
        %v116 = vld [vmem:[%s115] ss:$4 sm:$0xf]
        %s117 = scalar_lea.vmem %s113, 2
        %v118 = vld [vmem:[%s117] ss:$4 sm:$0xf]
        %v119 = vlaneseq
        %v120 = vand.u32 %v119, 127
        %v121 = vadd.s32 %v120, 128
        %v122 = vadd.s32 %v120, 256
        %v123 = vadd.s32 %v120, 384
        %v124 = vlaneseq
        %vm125 = vcmp.ge.s32.totalorder %v124, 0
        %vm126 = vcmp.lt.s32.totalorder %v124, 512
        %vm127 = vmand %vm125, %vm126
        %128 = vst.msk [vmem:[#allocation2] sm:$0xf] %vm127, 1e+10
        %129 = vst [vmem:[%s108] sm:$0x1] 0
        loop: start=0, step=1, limit=128
        $region25: #{tpu_custom_call.1} parent=23 // loop_pre_header
          _
        $region26: #{tpu_custom_call.1} parent=23 // loop_header
          %s131 = sphi 0, %s135
          %p132 = scmp.ge.s32.totalorder %s131, 128
        $region27: #{tpu_custom_call.1} parent=23 // loop_header_branch
          %134 = sbr.rel (%p132) target = $region31
        $region28: #{tpu_custom_call.1} parent=23 // loop_body
          %v136 = vld [vmem:[#allocation2] sm:$0xf]
          %v138 = vlaneseq
          %v139 = vshrl.u32 %v138, 7
          %v140 = vsub.s32 0, %v139
          %v141 = vrot.slane %v136, %v140
          %v142 = vlaneseq
          %v143 = vshrl.u32 %v142, 7
          %v144 = vsub.s32 1, %v143
          %v145 = vrot.slane %v136, %v144
          %v146 = vlaneseq
          %v147 = vshrl.u32 %v146, 7
          %v148 = vsub.s32 2, %v147
          %v149 = vrot.slane %v136, %v148
          %v150 = vlaneseq
          %v151 = vshrl.u32 %v150, 7
          %v152 = vsub.s32 3, %v151
          %v153 = vrot.slane %v136, %v152
          %vm158 = vcmask 1040384
          %v159 = vsel %vm158, %v141, -inf
          %v160 = vsel %vm158, %v145, -inf
          %v161 = vsel %vm158, %v149, -inf
          %v162 = vsel %vm158, %v153, -inf
          %v163 = vmax.f32 %v159, %v160
          %v164 = vmax.f32 %v161, %v162
          %v165 = vmax.f32 %v163, %v164
          %166 = vmax.xlane.f32.xlu0 %v165
          %v167 = vpop.xlane.xlu0 %166
          %v169 = vlaneseq
          %v170 = vshrl.u32 %v169, 7
          %v171 = vsub.s32 0, %v170
          %v172 = vrot.slane %v167, %v171
          %vm174 = vcmp.eq.f32.partialorder %v136, %v172
          %v175 = vcombine.low %v120, %v121
          %v176 = vcombine.low %v122, %v123
          %v178 = vunpack.c.l.s4 1966171168
          %v179 = vunpack.c.0.s8 %v178
          %v180 = vlaneseq
          %v181 = vshrl.u32 %v180, 7
          %v182 = vsub.s32 %v179, %v181
          %v183 = vrot.slane %v175, %v182
          %v185 = vunpack.c.l.s4 1966171168
          %v186 = vunpack.c.0.s8 %v185
          %v187 = vlaneseq
          %v188 = vshrl.u32 %v187, 7
          %v189 = vsub.s32 %v186, %v188
          %v190 = vrot.slane %v176, %v189
          %v191 = vcombine.low %v183, %v190
          %v193 = vunpack.c.l.s4 1966171168
          %v194 = vunpack.c.0.s8 %v193
          %v195 = vlaneseq
          %v196 = vshrl.u32 %v195, 7
          %v197 = vsub.s32 %v194, %v196
          %v198 = vrot.slane %v191, %v197
          %v199 = vsel %vm174, %v198, 512
          %v200 = vlaneseq
          %v201 = vshrl.u32 %v200, 7
          %v202 = vsub.s32 0, %v201
          %v203 = vrot.slane %v199, %v202
          %v204 = vlaneseq
          %v205 = vshrl.u32 %v204, 7
          %v206 = vsub.s32 1, %v205
          %v207 = vrot.slane %v199, %v206
          %v208 = vlaneseq
          %v209 = vshrl.u32 %v208, 7
          %v210 = vsub.s32 2, %v209
          %v211 = vrot.slane %v199, %v210
          %v212 = vlaneseq
          %v213 = vshrl.u32 %v212, 7
          %v214 = vsub.s32 3, %v213
          %v215 = vrot.slane %v199, %v214
          %v216 = vsel %vm158, %v203, 2147483647
          %v217 = vsel %vm158, %v207, 2147483647
          %v218 = vsel %vm158, %v211, 2147483647
          %v219 = vsel %vm158, %v215, 2147483647
          %vm220 = vcmp.lt.s32.totalorder %v216, %v217
          %v221 = vsel %vm220, %v216, %v217
          %vm222 = vcmp.lt.s32.totalorder %v218, %v219
          %v223 = vsel %vm222, %v218, %v219
          %vm224 = vcmp.lt.s32.totalorder %v221, %v223
          %v225 = vsel %vm224, %v221, %v223
          %v226 = vand.u32 %v225, 65535
          %v227 = vshra.s32 %v225, 16
          %v228 = vcvt.s32.f32 %v226
          %v229 = vcvt.s32.f32 %v227
          %230 = vmin.xlane.f32.xlu0 %v229
          %v231 = vpop.xlane.xlu0 %230
          %vm232 = vcmp.eq.f32.partialorder %v229, %v231
          %v233 = vsel %vm232, %v228, inf
          %234 = vmin.xlane.f32.xlu0 %v233
          %v235 = vpop.xlane.xlu0 %234
          %v236 = vcvt.f32.s32 %v235
          %v237 = vcvt.f32.s32 %v231
          %v238 = vshll.u32 %v237, 16
          %v239 = vadd.s32 %v238, %v236
          %v240 = vstv %s131
          %vm241 = vcmp.eq.s32.totalorder %v120, %v240
          %v242 = vld [vmem:[%s108] sm:$0x1]
          %v243 = vsel %vm241, %v239, %v242
          %244 = vst [vmem:[%s108] sm:$0x1] %v243
          %vm245 = vcmp.eq.s32.totalorder %v120, %v239
          %vm246 = vcmp.eq.s32.totalorder %v121, %v239
          %vm247 = vcmp.eq.s32.totalorder %v122, %v239
          %vm248 = vcmp.eq.s32.totalorder %v123, %v239
          %v250 = vlaneseq
          %v251 = vshrl.u32 %v250, 7
          %v252 = vsub.s32 0, %v251
          %v253 = vrot.slane %v114, %v252
          %v254 = vlaneseq
          %v255 = vshrl.u32 %v254, 7
          %v256 = vsub.s32 1, %v255
          %v257 = vrot.slane %v114, %v256
          %v258 = vlaneseq
          %v259 = vshrl.u32 %v258, 7
          %v260 = vsub.s32 2, %v259
          %v261 = vrot.slane %v114, %v260
          %v262 = vlaneseq
          %v263 = vshrl.u32 %v262, 7
          %v264 = vsub.s32 3, %v263
          %v265 = vrot.slane %v114, %v264
          %v270 = vsel %vm245, %v253, 0.0
          %v271 = vsel %vm246, %v257, 0.0
          %v272 = vsel %vm247, %v261, 0.0
          %v273 = vsel %vm248, %v265, 0.0
          %v274 = vsel %vm158, %v270, 0.0
          %v275 = vsel %vm158, %v271, 0.0
          %v276 = vadd.f32 %v274, %v275
          %v277 = vsel %vm158, %v272, 0.0
          %v278 = vadd.f32 %v276, %v277
          %v279 = vsel %vm158, %v273, 0.0
          %v280 = vadd.f32 %v278, %v279
          %281 = vadd.xlane.f32.xlu0 %v280
          %v282 = vpop.xlane.xlu0 %281
          %v284 = vlaneseq
          %v285 = vshrl.u32 %v284, 7
          %v286 = vsub.s32 0, %v285
          %v287 = vrot.slane %v116, %v286
          %v288 = vlaneseq
          %v289 = vshrl.u32 %v288, 7
          %v290 = vsub.s32 1, %v289
          %v291 = vrot.slane %v116, %v290
          %v292 = vlaneseq
          %v293 = vshrl.u32 %v292, 7
          %v294 = vsub.s32 2, %v293
          %v295 = vrot.slane %v116, %v294
          %v296 = vlaneseq
          %v297 = vshrl.u32 %v296, 7
          %v298 = vsub.s32 3, %v297
          %v299 = vrot.slane %v116, %v298
          %v304 = vsel %vm245, %v287, 0.0
          %v305 = vsel %vm246, %v291, 0.0
          %v306 = vsel %vm247, %v295, 0.0
          %v307 = vsel %vm248, %v299, 0.0
          %v308 = vsel %vm158, %v304, 0.0
          %v309 = vsel %vm158, %v305, 0.0
          %v310 = vadd.f32 %v308, %v309
          %v311 = vsel %vm158, %v306, 0.0
          %v312 = vadd.f32 %v310, %v311
          %v313 = vsel %vm158, %v307, 0.0
          %v314 = vadd.f32 %v312, %v313
          %315 = vadd.xlane.f32.xlu0 %v314
          %v316 = vpop.xlane.xlu0 %315
          %v318 = vlaneseq
          %v319 = vshrl.u32 %v318, 7
          %v320 = vsub.s32 0, %v319
          %v321 = vrot.slane %v118, %v320
          %v322 = vlaneseq
          %v323 = vshrl.u32 %v322, 7
          %v324 = vsub.s32 1, %v323
          %v325 = vrot.slane %v118, %v324
          %v326 = vlaneseq
          %v327 = vshrl.u32 %v326, 7
          %v328 = vsub.s32 2, %v327
          %v329 = vrot.slane %v118, %v328
          %v330 = vlaneseq
          %v331 = vshrl.u32 %v330, 7
          %v332 = vsub.s32 3, %v331
          %v333 = vrot.slane %v118, %v332
          %v338 = vsel %vm245, %v321, 0.0
          %v339 = vsel %vm246, %v325, 0.0
          %v340 = vsel %vm247, %v329, 0.0
          %v341 = vsel %vm248, %v333, 0.0
          %v342 = vsel %vm158, %v338, 0.0
          %v343 = vsel %vm158, %v339, 0.0
          %v344 = vadd.f32 %v342, %v343
          %v345 = vsel %vm158, %v340, 0.0
          %v346 = vadd.f32 %v344, %v345
          %v347 = vsel %vm158, %v341, 0.0
          %v348 = vadd.f32 %v346, %v347
          %349 = vadd.xlane.f32.xlu0 %v348
          %v350 = vpop.xlane.xlu0 %349
          %v352 = vlaneseq
          %v353 = vshrl.u32 %v352, 7
          %v354 = vsub.s32 0, %v353
          %v355 = vrot.slane %v282, %v354
          %v357 = vsub.f32 %v114, %v355
          %v358 = vmul.f32 %v357, %v357
          %v360 = vlaneseq
          %v361 = vshrl.u32 %v360, 7
          %v362 = vsub.s32 0, %v361
          %v363 = vrot.slane %v316, %v362
          %v365 = vsub.f32 %v116, %v363
          %v366 = vmul.f32 %v365, %v365
          %v367 = vadd.f32 %v358, %v366
          %v369 = vlaneseq
          %v370 = vshrl.u32 %v369, 7
          %v371 = vsub.s32 0, %v370
          %v372 = vrot.slane %v350, %v371
          %v374 = vsub.f32 %v118, %v372
          %v375 = vmul.f32 %v374, %v374
          %v376 = vadd.f32 %v367, %v375
          %v377 = vmin.f32 %v136, %v376
          %378 = vst.msk [vmem:[#allocation2] sm:$0xf] %vm127, %v377
        $region29: #{tpu_custom_call.1} parent=23 // loop_footer
          %s135 = sadd.s32 1, %s131
        $region30: #{tpu_custom_call.1} parent=23 // loop_footer_branch
          %130 = sbr.rel target = $region26
        $region31: #{tpu_custom_call.1} parent=23 // loop_exit
          _
        %s379 = sand.u32 %s49, 1
        %s380 = scalar_lea.sflag [#allocation4], %s379
        %s381 = sand.u32 %s49, 1
        %s382 = scalar_lea.vmem [#allocation3], %s381
        // Predicated region
        $region32: #{tpu_custom_call.1} parent=23 // pred_check
          %p383 = pneg %p59
        $region33: #{tpu_custom_call.1} parent=23 // pred_check_branch
          %385 = sbr.rel (%p383) target = $region35
        $region34: #{tpu_custom_call.1} parent=23 // pred_region
          %s387 = ssub.s32 16, 16
          %388 = vsyncadd %s380, %s387
          %s389 = smul.addr %s15, 16
          %s390 = scalar_lea.hbm %s1, %s389
          %s392 = sshll.u32 %s382, 4
          %s393 = int_to_ptr.vmem [resolvable:$true] %s392
          %395 = dma.vmem_to_hbm [thread:$0]  %s393, 16, %s390, %s380
        $region35: #{tpu_custom_call.1} parent=23 // pred_fallthru
          _
      $region24: #{tpu_custom_call.1} parent=5 // pred_fallthru
        _
      %p396 = scmp.le.s32.totalorder 2, %s10
      // Predicated region
      $region36: #{tpu_custom_call.1} parent=5 // pred_check
        %p397 = pneg %p396
      $region37: #{tpu_custom_call.1} parent=5 // pred_check_branch
        %399 = sbr.rel (%p397) target = $region39
      $region38: #{tpu_custom_call.1} parent=5 // pred_region
        %s400 = ssub.s32 %s10, 2
        // Predicated region
        $region40: #{tpu_custom_call.1} parent=38 // pred_check
          %p401 = pneg %p65
        $region41: #{tpu_custom_call.1} parent=38 // pred_check_branch
          %403 = sbr.rel (%p401) target = $region43
        $region42: #{tpu_custom_call.1} parent=38 // pred_region
          %s404 = sand.u32 %s50, 1
          %s405 = scalar_lea.sflag [#allocation4], %s404
          %s406 = sand.u32 %s50, 1
          %s407 = scalar_lea.vmem [#allocation3], %s406
          %408 = dma.done %s405, 16
        $region43: #{tpu_custom_call.1} parent=38 // pred_fallthru
          _
      $region39: #{tpu_custom_call.1} parent=5 // pred_fallthru
        _
    $region6: #{tpu_custom_call.1} parent=1 // loop_footer
      %s14 = sadd.s32 1, %s10
    $region7: #{tpu_custom_call.1} parent=1 // loop_footer_branch
      %9 = sbr.rel target = $region3
    $region8: #{tpu_custom_call.1} parent=1 // loop_exit
      _
    %409 = vsyncpa [#allocation4], 1
    %s410 = scalar_lea.sflag [#allocation4], 1
    %411 = vsyncpa %s410, 1

</llo_original>
